<compile_context>
chip_gen: v7x
topology: tpu7x:2x2x1
jax: 0.10.0
libtpu: 0.0.40
codegen_flags: <defaults>
</compile_context>

<pallas_src>
import functools

import jax
import jax.numpy as jnp
from jax.experimental import pallas as pl
from jax.experimental.pallas import tpu as pltpu


def _round_up(x, m):
    return (x + m - 1) // m * m


def expert_forward(x, w1, b1, w2, b2, *, block_m=512, out_dtype=None,
                   _force=None):
    """Fused multi-expert MLP: y[e] = relu(x @ w1[e] + b1[e]) @ w2[e] + b2[e].

    x : (B, In)
    w1: (E, In, H)  or (In, H)     b1: (E, H)   or (H,)
    w2: (E, H, Out) or (H, Out)    b2: (E, Out) or (Out,)
    Returns (E, B, Out) for stacked weights, (B, Out) for a single expert.
    Per-expert semantics match PyTorch Expert.forward (bf16 MXU operands,
    f32 accumulation / bias / ReLU).
    _force: None | "resident" | "stream" (testing hook).
    """
    single = (w1.ndim == 2)
    if single:
        w1, b1, w2, b2 = w1[None], b1[None], w2[None], b2[None]
    E, In, H = w1.shape
    Out = w2.shape[-1]
    B = x.shape[0]
    out_dtype = x.dtype if out_dtype is None else out_dtype
    out_bytes = jnp.dtype(out_dtype).itemsize

    # ---- wrapper-side layout plumbing (cheap XLA ops) ---------------------
    x_bf = x.astype(jnp.bfloat16)
    w1_bf = w1.astype(jnp.bfloat16)
    w2_bf = w2.astype(jnp.bfloat16)
    b1_f32 = b1.astype(jnp.float32)
    b2_f32 = b2.astype(jnp.float32)

    # Pad H and Out to lane multiples of 128.  Zero padding is inert:
    # relu(0 + 0) = 0 through fc1, and zero rows of w2 contribute nothing.
    H_pad = _round_up(H, 128)
    Out_pad = _round_up(Out, 128)
    if H_pad != H:
        w1_bf = jnp.pad(w1_bf, ((0, 0), (0, 0), (0, H_pad - H)))
        b1_f32 = jnp.pad(b1_f32, ((0, 0), (0, H_pad - H)))
        w2_bf = jnp.pad(w2_bf, ((0, 0), (0, H_pad - H), (0, 0)))
    if Out_pad != Out:
        w2_bf = jnp.pad(w2_bf, ((0, 0), (0, 0), (0, Out_pad - Out)))
        b2_f32 = jnp.pad(b2_f32, ((0, 0), (0, Out_pad - Out)))
    b1_f32 = b1_f32.reshape(E, 1, H_pad)
    b2_f32 = b2_f32.reshape(E, 1, Out_pad)

    # ---- VMEM budgeting (generation-aware) --------------------------------
    try:
        vmem_cap = int(pltpu.get_tpu_info().vmem_capacity_bytes)
    except Exception:
        vmem_cap = 64 * 1024 * 1024  # conservative (v7x-sized) fallback
    vmem_budget = int(vmem_cap * 0.75)

    # Per-expert / all-expert weight bytes, conservatively double-buffered.
    w_expert_bytes = In * H_pad * 2 + H_pad * Out_pad * 2 + H_pad * 4 + Out_pad * 4
    w_res_bytes = 2 * E * w_expert_bytes
    w_stream_bytes = 2 * w_expert_bytes

    def io_bytes(tm, e_mult):
        # double-buffered x tile + output tile, plus one f32 intermediate h
        return (2 * tm * In * 2
                + 2 * e_mult * tm * Out_pad * out_bytes
                + tm * H_pad * 4)

    # ---- batch-tile selection ---------------------------------------------
    block_m = max(16, _round_up(block_m, 16))     # bf16 sublane packing
    b16 = _round_up(B, 16)
    tm = min(block_m, b16)

    resident = (w_res_bytes + io_bytes(tm, E)) <= vmem_budget
    if _force == "resident":
        resident = True
    elif _force == "stream":
        resident = False

    if resident:
        # Keep >= 2 batch tiles when possible so the single parallel grid
        # axis can still span both v7x TensorCores.
        if b16 // tm < 2 and b16 >= 32:
            tm = _round_up((b16 + 1) // 2, 16)
    else:
        # Shrink the batch tile until the per-expert streaming footprint fits.
        while tm > 16 and (w_stream_bytes + io_bytes(tm, 1)) > vmem_budget:
            tm = _round_up(tm // 2, 16)

    B_pad = _round_up(B, tm)
    if B_pad != B:
        x_bf = jnp.pad(x_bf, ((0, B_pad - B), (0, 0)))
    num_bt = B_pad // tm

    needed = (w_res_bytes + io_bytes(tm, E)) if resident \
        else (w_stream_bytes + io_bytes(tm, 1))
    vmem_limit = int(min(vmem_cap * 0.8,
                         max(2 * needed, 32 * 1024 * 1024)))

    # ---- kernels -----------------------------------------------------------
    if resident:
        def resident_kernel(x_ref, w1_ref, b1_ref, w2_ref, b2_ref, o_ref):
            xb = x_ref[...]                      # (tm, In) bf16
            for e in range(E):                   # static unroll over experts
                h = jnp.dot(xb, w1_ref[e],
                            preferred_element_type=jnp.float32)
                h = jnp.maximum(h + b1_ref[e], 0.0)
                y = jnp.dot(h.astype(w2_ref.dtype), w2_ref[e],
                            preferred_element_type=jnp.float32)
                o_ref[e] = (y + b2_ref[e]).astype(o_ref.dtype)

        out = pl.pallas_call(
            resident_kernel,
            out_shape=jax.ShapeDtypeStruct((E, B_pad, Out_pad), out_dtype),
            grid_spec=pltpu.PrefetchScalarGridSpec(
                num_scalar_prefetch=0,
                grid=(num_bt,),
                in_specs=[
                    # activations: one batch tile per grid step
                    pl.BlockSpec((tm, In), lambda b: (b, 0)),
                    # all expert weights/biases: constant index_map ->
                    # DMA'd once, VMEM-resident across every batch tile.
                    pl.BlockSpec((E, In, H_pad), lambda b: (0, 0, 0)),
                    pl.BlockSpec((E, 1, H_pad), lambda b: (0, 0, 0)),
                    pl.BlockSpec((E, H_pad, Out_pad), lambda b: (0, 0, 0)),
                    pl.BlockSpec((E, 1, Out_pad), lambda b: (0, 0, 0)),
                ],
                out_specs=pl.BlockSpec((E, tm, Out_pad), lambda b: (0, b, 0)),
            ),
            compiler_params=pltpu.CompilerParams(
                dimension_semantics=("parallel",),
                vmem_limit_bytes=vmem_limit,
            ),
        )(x_bf, w1_bf, b1_f32, w2_bf, b2_f32)
    else:
        def stream_kernel(x_ref, w1_ref, b1_ref, w2_ref, b2_ref, o_ref):
            h = jnp.dot(x_ref[...], w1_ref[...],
                        preferred_element_type=jnp.float32)
            h = jnp.maximum(h + b1_ref[...], 0.0)
            y = jnp.dot(h.astype(w2_ref.dtype), w2_ref[...],
                        preferred_element_type=jnp.float32)
            o_ref[...] = (y + b2_ref[...]).astype(o_ref.dtype)

        # Grid order by re-stream traffic: experts-outer re-streams x once
        # per expert; batch-outer re-streams the per-expert weights once per
        # batch tile.  Pick whichever moves fewer HBM bytes.
        x_restream = E * B_pad * In * 2
        w_restream = num_bt * E * (In * H_pad * 2 + H_pad * Out_pad * 2)
        experts_outer = x_restream <= w_restream
        if experts_outer:
            grid = (E, num_bt)
            eidx = lambda i, j: i
            bidx = lambda i, j: j
        else:
            grid = (num_bt, E)
            eidx = lambda i, j: j
            bidx = lambda i, j: i

        out = pl.pallas_call(
            stream_kernel,
            out_shape=jax.ShapeDtypeStruct((E, B_pad, Out_pad), out_dtype),
            grid_spec=pltpu.PrefetchScalarGridSpec(
                num_scalar_prefetch=0,
                grid=grid,
                in_specs=[
                    pl.BlockSpec((tm, In), lambda i, j: (bidx(i, j), 0)),
                    pl.BlockSpec((None, In, H_pad),
                                 lambda i, j: (eidx(i, j), 0, 0)),
                    pl.BlockSpec((None, 1, H_pad),
                                 lambda i, j: (eidx(i, j), 0, 0)),
                    pl.BlockSpec((None, H_pad, Out_pad),
                                 lambda i, j: (eidx(i, j), 0, 0)),
                    pl.BlockSpec((None, 1, Out_pad),
                                 lambda i, j: (eidx(i, j), 0, 0)),
                ],
                out_specs=pl.BlockSpec(
                    (None, tm, Out_pad),
                    lambda i, j: (eidx(i, j), bidx(i, j), 0)),
            ),
            compiler_params=pltpu.CompilerParams(
                dimension_semantics=("parallel", "parallel"),
                vmem_limit_bytes=vmem_limit,
            ),
        )(x_bf, w1_bf, b1_f32, w2_bf, b2_f32)

    out = out[:, :B, :Out]
    return out[0] if single else out


if __name__ == "__main__":
    # Shapes consistent with Expert(input_size, output_size, hidden_size),
    # fused over the several experts an MMoE layer would instantiate.
    batch = 8
    input_size = 32
    hidden_size = 32
    output_size = 16
    num_experts = 4

    key = jax.random.PRNGKey(0)
    kx, k1, k2, k3, k4 = jax.random.split(key, 5)

    x = jax.random.normal(kx, (batch, input_size), dtype=jnp.float32)
    bound1 = 1.0 / (input_size ** 0.5)
    bound2 = 1.0 / (hidden_size ** 0.5)
    w1 = jax.random.uniform(k1, (num_experts, input_size, hidden_size),
                            minval=-bound1, maxval=bound1, dtype=jnp.float32)
    b1 = jax.random.uniform(k2, (num_experts, hidden_size),
                            minval=-bound1, maxval=bound1, dtype=jnp.float32)
    w2 = jax.random.uniform(k3, (num_experts, hidden_size, output_size),
                            minval=-bound2, maxval=bound2, dtype=jnp.float32)
    b2 = jax.random.uniform(k4, (num_experts, output_size),
                            minval=-bound2, maxval=bound2, dtype=jnp.float32)

    # Default (resident-weights) path.
    y = jax.jit(expert_forward)(x, w1, b1, w2, b2)
    jax.block_until_ready(y)
    assert y.shape == (num_experts, batch, output_size)

    # Reference matching the kernel's precision choice (bf16 MXU operands,
    # f32 accumulation / bias / ReLU).
    xb = x.astype(jnp.bfloat16).astype(jnp.float32)
    w1b = w1.astype(jnp.bfloat16).astype(jnp.float32)
    w2b = w2.astype(jnp.bfloat16).astype(jnp.float32)
    h_ref = jnp.maximum(jnp.einsum("bi,eih->ebh", xb, w1b) + b1[:, None, :], 0.0)
    hb = h_ref.astype(jnp.bfloat16).astype(jnp.float32)
    ref_bf = jnp.einsum("ebh,eho->ebo", hb, w2b) + b2[:, None, :]
    assert jnp.allclose(y, ref_bf, atol=5e-3, rtol=5e-3)

    # Loose check against the full-f32 PyTorch-equivalent forward.
    ref_f32 = (jnp.einsum(
        "ebh,eho->ebo",
        jnp.maximum(jnp.einsum("bi,eih->ebh", x, w1) + b1[:, None, :], 0.0),
        w2) + b2[:, None, :])
    assert jnp.allclose(y, ref_f32, atol=5e-2, rtol=5e-2)

    # Streaming (large-weights fallback) path produces the same result.
    y_stream = jax.jit(functools.partial(expert_forward, _force="stream"))(
        x, w1, b1, w2, b2)
    jax.block_until_ready(y_stream)
    assert jnp.allclose(y, y_stream, atol=1e-5, rtol=1e-5)

    # Single-expert (2-D weights) path matches the stacked result.
    y0 = jax.jit(expert_forward)(x, w1[0], b1[0], w2[0], b2[0])
    jax.block_until_ready(y0)
    assert y0.shape == (batch, output_size)
    assert jnp.allclose(y0, y[0], atol=1e-5, rtol=1e-5)

    print("KERNEL_OK")
</pallas_src>

<mosaic_0001>
module attributes {stable_mosaic.version = 11 : i64} {
  func.func @resident_kernel(%arg0: i32, %arg1: memref<16x32xbf16, #tpu.memory_space<vmem>>, %arg2: memref<4x32x128xbf16, #tpu.memory_space<vmem>>, %arg3: memref<4x1x128xf32, #tpu.memory_space<vmem>>, %arg4: memref<4x128x128xbf16, #tpu.memory_space<vmem>>, %arg5: memref<4x1x128xf32, #tpu.memory_space<vmem>>, %arg6: memref<4x16x128xf32, #tpu.memory_space<vmem>>) attributes {dimension_semantics = [#tpu.dimension_semantics<parallel>], iteration_bounds = array<i64: 1>, scalar_prefetch = 0 : i64, scratch_operands = 0 : i64, tpu.core_type = #tpu.core_type<tc>, window_params = [{transform_indices = @transform_0, window_bounds = array<i64: 16, 32>}, {pipeline_mode = #tpu.pipeline_mode<synchronous>, transform_indices = @transform_1, window_bounds = array<i64: 4, 32, 128>}, {pipeline_mode = #tpu.pipeline_mode<synchronous>, transform_indices = @transform_2, window_bounds = array<i64: 4, 1, 128>}, {pipeline_mode = #tpu.pipeline_mode<synchronous>, transform_indices = @transform_3, window_bounds = array<i64: 4, 128, 128>}, {pipeline_mode = #tpu.pipeline_mode<synchronous>, transform_indices = @transform_4, window_bounds = array<i64: 4, 1, 128>}, {transform_indices = @transform_5, window_bounds = array<i64: 4, 16, 128>}]} {
    %c0 = arith.constant 0 : index
    %c0_0 = arith.constant 0 : index
    %0 = vector.load %arg1[%c0, %c0_0] : memref<16x32xbf16, #tpu.memory_space<vmem>>, vector<16x32xbf16>
    %c0_1 = arith.constant 0 : index
    %c0_2 = arith.constant 0 : index
    %c0_3 = arith.constant 0 : index
    %1 = vector.load %arg2[%c0_1, %c0_2, %c0_3] : memref<4x32x128xbf16, #tpu.memory_space<vmem>>, vector<1x32x128xbf16>
    %2 = vector.shape_cast %1 : vector<1x32x128xbf16> to vector<32x128xbf16>
    %cst = arith.constant dense<0.000000e+00> : vector<16x128xf32>
    %3 = tpu.matmul %0, %2, %cst {dimension_numbers = #tpu.dot_dimension_numbers<[1], [0], [0], [1], [0, 0, 1, 1], [], []>} : vector<16x32xbf16>, vector<32x128xbf16>, vector<16x128xf32> -> vector<16x128xf32>
    %c0_4 = arith.constant 0 : index
    %c0_5 = arith.constant 0 : index
    %c0_6 = arith.constant 0 : index
    %4 = vector.load %arg3[%c0_4, %c0_5, %c0_6] : memref<4x1x128xf32, #tpu.memory_space<vmem>>, vector<1x1x128xf32>
    %5 = vector.shape_cast %4 : vector<1x1x128xf32> to vector<1x128xf32>
    %6 = vector.broadcast %5 : vector<1x128xf32> to vector<16x128xf32>
    %7 = arith.addf %3, %6 : vector<16x128xf32>
    %cst_7 = arith.constant 0.000000e+00 : f32
    %8 = vector.broadcast %cst_7 : f32 to vector<16x128xf32>
    %9 = arith.maximumf %7, %8 : vector<16x128xf32>
    %10 = arith.truncf %9 : vector<16x128xf32> to vector<16x128xbf16>
    %c0_8 = arith.constant 0 : index
    %c0_9 = arith.constant 0 : index
    %c0_10 = arith.constant 0 : index
    %11 = vector.load %arg4[%c0_8, %c0_9, %c0_10] : memref<4x128x128xbf16, #tpu.memory_space<vmem>>, vector<1x128x128xbf16>
    %12 = vector.shape_cast %11 : vector<1x128x128xbf16> to vector<128x128xbf16>
    %cst_11 = arith.constant dense<0.000000e+00> : vector<16x128xf32>
    %13 = tpu.matmul %10, %12, %cst_11 {dimension_numbers = #tpu.dot_dimension_numbers<[1], [0], [0], [1], [0, 0, 1, 1], [], []>} : vector<16x128xbf16>, vector<128x128xbf16>, vector<16x128xf32> -> vector<16x128xf32>
    %c0_12 = arith.constant 0 : index
    %c0_13 = arith.constant 0 : index
    %c0_14 = arith.constant 0 : index
    %14 = vector.load %arg5[%c0_12, %c0_13, %c0_14] : memref<4x1x128xf32, #tpu.memory_space<vmem>>, vector<1x1x128xf32>
    %15 = vector.shape_cast %14 : vector<1x1x128xf32> to vector<1x128xf32>
    %16 = vector.broadcast %15 : vector<1x128xf32> to vector<16x128xf32>
    %17 = arith.addf %13, %16 : vector<16x128xf32>
    %c0_15 = arith.constant 0 : index
    %c0_16 = arith.constant 0 : index
    %c0_17 = arith.constant 0 : index
    %18 = vector.load %arg6[%c0_15, %c0_16, %c0_17] : memref<4x16x128xf32, #tpu.memory_space<vmem>>, vector<1x16x128xf32>
    %19 = vector.shape_cast %18 : vector<1x16x128xf32> to vector<16x128xf32>
    %20 = vector.shape_cast %17 : vector<16x128xf32> to vector<1x16x128xf32>
    tpu.vector_store %arg6[%c0_15, %c0_16, %c0_17], %20 {strides = array<i32>} : memref<4x16x128xf32, #tpu.memory_space<vmem>>, vector<1x16x128xf32>,
    %c1 = arith.constant 1 : index
    %c0_18 = arith.constant 0 : index
    %c0_19 = arith.constant 0 : index
    %21 = vector.load %arg2[%c1, %c0_18, %c0_19] : memref<4x32x128xbf16, #tpu.memory_space<vmem>>, vector<1x32x128xbf16>
    %22 = vector.shape_cast %21 : vector<1x32x128xbf16> to vector<32x128xbf16>
    %cst_20 = arith.constant dense<0.000000e+00> : vector<16x128xf32>
    %23 = tpu.matmul %0, %22, %cst_20 {dimension_numbers = #tpu.dot_dimension_numbers<[1], [0], [0], [1], [0, 0, 1, 1], [], []>} : vector<16x32xbf16>, vector<32x128xbf16>, vector<16x128xf32> -> vector<16x128xf32>
    %c1_21 = arith.constant 1 : index
    %c0_22 = arith.constant 0 : index
    %c0_23 = arith.constant 0 : index
    %24 = vector.load %arg3[%c1_21, %c0_22, %c0_23] : memref<4x1x128xf32, #tpu.memory_space<vmem>>, vector<1x1x128xf32>
    %25 = vector.shape_cast %24 : vector<1x1x128xf32> to vector<1x128xf32>
    %26 = vector.broadcast %25 : vector<1x128xf32> to vector<16x128xf32>
    %27 = arith.addf %23, %26 : vector<16x128xf32>
    %cst_24 = arith.constant 0.000000e+00 : f32
    %28 = vector.broadcast %cst_24 : f32 to vector<16x128xf32>
    %29 = arith.maximumf %27, %28 : vector<16x128xf32>
    %30 = arith.truncf %29 : vector<16x128xf32> to vector<16x128xbf16>
    %c1_25 = arith.constant 1 : index
    %c0_26 = arith.constant 0 : index
    %c0_27 = arith.constant 0 : index
    %31 = vector.load %arg4[%c1_25, %c0_26, %c0_27] : memref<4x128x128xbf16, #tpu.memory_space<vmem>>, vector<1x128x128xbf16>
    %32 = vector.shape_cast %31 : vector<1x128x128xbf16> to vector<128x128xbf16>
    %cst_28 = arith.constant dense<0.000000e+00> : vector<16x128xf32>
    %33 = tpu.matmul %30, %32, %cst_28 {dimension_numbers = #tpu.dot_dimension_numbers<[1], [0], [0], [1], [0, 0, 1, 1], [], []>} : vector<16x128xbf16>, vector<128x128xbf16>, vector<16x128xf32> -> vector<16x128xf32>
    %c1_29 = arith.constant 1 : index
    %c0_30 = arith.constant 0 : index
    %c0_31 = arith.constant 0 : index
    %34 = vector.load %arg5[%c1_29, %c0_30, %c0_31] : memref<4x1x128xf32, #tpu.memory_space<vmem>>, vector<1x1x128xf32>
    %35 = vector.shape_cast %34 : vector<1x1x128xf32> to vector<1x128xf32>
    %36 = vector.broadcast %35 : vector<1x128xf32> to vector<16x128xf32>
    %37 = arith.addf %33, %36 : vector<16x128xf32>
    %c1_32 = arith.constant 1 : index
    %c0_33 = arith.constant 0 : index
    %c0_34 = arith.constant 0 : index
    %38 = vector.load %arg6[%c1_32, %c0_33, %c0_34] : memref<4x16x128xf32, #tpu.memory_space<vmem>>, vector<1x16x128xf32>
    %39 = vector.shape_cast %38 : vector<1x16x128xf32> to vector<16x128xf32>
    %40 = vector.shape_cast %37 : vector<16x128xf32> to vector<1x16x128xf32>
    tpu.vector_store %arg6[%c1_32, %c0_33, %c0_34], %40 {strides = array<i32>} : memref<4x16x128xf32, #tpu.memory_space<vmem>>, vector<1x16x128xf32>,
    %c2 = arith.constant 2 : index
    %c0_35 = arith.constant 0 : index
    %c0_36 = arith.constant 0 : index
    %41 = vector.load %arg2[%c2, %c0_35, %c0_36] : memref<4x32x128xbf16, #tpu.memory_space<vmem>>, vector<1x32x128xbf16>
    %42 = vector.shape_cast %41 : vector<1x32x128xbf16> to vector<32x128xbf16>
    %cst_37 = arith.constant dense<0.000000e+00> : vector<16x128xf32>
    %43 = tpu.matmul %0, %42, %cst_37 {dimension_numbers = #tpu.dot_dimension_numbers<[1], [0], [0], [1], [0, 0, 1, 1], [], []>} : vector<16x32xbf16>, vector<32x128xbf16>, vector<16x128xf32> -> vector<16x128xf32>
    %c2_38 = arith.constant 2 : index
    %c0_39 = arith.constant 0 : index
    %c0_40 = arith.constant 0 : index
    %44 = vector.load %arg3[%c2_38, %c0_39, %c0_40] : memref<4x1x128xf32, #tpu.memory_space<vmem>>, vector<1x1x128xf32>
    %45 = vector.shape_cast %44 : vector<1x1x128xf32> to vector<1x128xf32>
    %46 = vector.broadcast %45 : vector<1x128xf32> to vector<16x128xf32>
    %47 = arith.addf %43, %46 : vector<16x128xf32>
    %cst_41 = arith.constant 0.000000e+00 : f32
    %48 = vector.broadcast %cst_41 : f32 to vector<16x128xf32>
    %49 = arith.maximumf %47, %48 : vector<16x128xf32>
    %50 = arith.truncf %49 : vector<16x128xf32> to vector<16x128xbf16>
    %c2_42 = arith.constant 2 : index
    %c0_43 = arith.constant 0 : index
    %c0_44 = arith.constant 0 : index
    %51 = vector.load %arg4[%c2_42, %c0_43, %c0_44] : memref<4x128x128xbf16, #tpu.memory_space<vmem>>, vector<1x128x128xbf16>
    %52 = vector.shape_cast %51 : vector<1x128x128xbf16> to vector<128x128xbf16>
    %cst_45 = arith.constant dense<0.000000e+00> : vector<16x128xf32>
    %53 = tpu.matmul %50, %52, %cst_45 {dimension_numbers = #tpu.dot_dimension_numbers<[1], [0], [0], [1], [0, 0, 1, 1], [], []>} : vector<16x128xbf16>, vector<128x128xbf16>, vector<16x128xf32> -> vector<16x128xf32>
    %c2_46 = arith.constant 2 : index
    %c0_47 = arith.constant 0 : index
    %c0_48 = arith.constant 0 : index
    %54 = vector.load %arg5[%c2_46, %c0_47, %c0_48] : memref<4x1x128xf32, #tpu.memory_space<vmem>>, vector<1x1x128xf32>
    %55 = vector.shape_cast %54 : vector<1x1x128xf32> to vector<1x128xf32>
    %56 = vector.broadcast %55 : vector<1x128xf32> to vector<16x128xf32>
    %57 = arith.addf %53, %56 : vector<16x128xf32>
    %c2_49 = arith.constant 2 : index
    %c0_50 = arith.constant 0 : index
    %c0_51 = arith.constant 0 : index
    %58 = vector.load %arg6[%c2_49, %c0_50, %c0_51] : memref<4x16x128xf32, #tpu.memory_space<vmem>>, vector<1x16x128xf32>
    %59 = vector.shape_cast %58 : vector<1x16x128xf32> to vector<16x128xf32>
    %60 = vector.shape_cast %57 : vector<16x128xf32> to vector<1x16x128xf32>
    tpu.vector_store %arg6[%c2_49, %c0_50, %c0_51], %60 {strides = array<i32>} : memref<4x16x128xf32, #tpu.memory_space<vmem>>, vector<1x16x128xf32>,
    %c3 = arith.constant 3 : index
    %c0_52 = arith.constant 0 : index
    %c0_53 = arith.constant 0 : index
    %61 = vector.load %arg2[%c3, %c0_52, %c0_53] : memref<4x32x128xbf16, #tpu.memory_space<vmem>>, vector<1x32x128xbf16>
    %62 = vector.shape_cast %61 : vector<1x32x128xbf16> to vector<32x128xbf16>
    %cst_54 = arith.constant dense<0.000000e+00> : vector<16x128xf32>
    %63 = tpu.matmul %0, %62, %cst_54 {dimension_numbers = #tpu.dot_dimension_numbers<[1], [0], [0], [1], [0, 0, 1, 1], [], []>} : vector<16x32xbf16>, vector<32x128xbf16>, vector<16x128xf32> -> vector<16x128xf32>
    %c3_55 = arith.constant 3 : index
    %c0_56 = arith.constant 0 : index
    %c0_57 = arith.constant 0 : index
    %64 = vector.load %arg3[%c3_55, %c0_56, %c0_57] : memref<4x1x128xf32, #tpu.memory_space<vmem>>, vector<1x1x128xf32>
    %65 = vector.shape_cast %64 : vector<1x1x128xf32> to vector<1x128xf32>
    %66 = vector.broadcast %65 : vector<1x128xf32> to vector<16x128xf32>
    %67 = arith.addf %63, %66 : vector<16x128xf32>
    %cst_58 = arith.constant 0.000000e+00 : f32
    %68 = vector.broadcast %cst_58 : f32 to vector<16x128xf32>
    %69 = arith.maximumf %67, %68 : vector<16x128xf32>
    %70 = arith.truncf %69 : vector<16x128xf32> to vector<16x128xbf16>
    %c3_59 = arith.constant 3 : index
    %c0_60 = arith.constant 0 : index
    %c0_61 = arith.constant 0 : index
    %71 = vector.load %arg4[%c3_59, %c0_60, %c0_61] : memref<4x128x128xbf16, #tpu.memory_space<vmem>>, vector<1x128x128xbf16>
    %72 = vector.shape_cast %71 : vector<1x128x128xbf16> to vector<128x128xbf16>
    %cst_62 = arith.constant dense<0.000000e+00> : vector<16x128xf32>
    %73 = tpu.matmul %70, %72, %cst_62 {dimension_numbers = #tpu.dot_dimension_numbers<[1], [0], [0], [1], [0, 0, 1, 1], [], []>} : vector<16x128xbf16>, vector<128x128xbf16>, vector<16x128xf32> -> vector<16x128xf32>
    %c3_63 = arith.constant 3 : index
    %c0_64 = arith.constant 0 : index
    %c0_65 = arith.constant 0 : index
    %74 = vector.load %arg5[%c3_63, %c0_64, %c0_65] : memref<4x1x128xf32, #tpu.memory_space<vmem>>, vector<1x1x128xf32>
    %75 = vector.shape_cast %74 : vector<1x1x128xf32> to vector<1x128xf32>
    %76 = vector.broadcast %75 : vector<1x128xf32> to vector<16x128xf32>
    %77 = arith.addf %73, %76 : vector<16x128xf32>
    %c3_66 = arith.constant 3 : index
    %c0_67 = arith.constant 0 : index
    %c0_68 = arith.constant 0 : index
    %78 = vector.load %arg6[%c3_66, %c0_67, %c0_68] : memref<4x16x128xf32, #tpu.memory_space<vmem>>, vector<1x16x128xf32>
    %79 = vector.shape_cast %78 : vector<1x16x128xf32> to vector<16x128xf32>
    %80 = vector.shape_cast %77 : vector<16x128xf32> to vector<1x16x128xf32>
    tpu.vector_store %arg6[%c3_66, %c0_67, %c0_68], %80 {strides = array<i32>} : memref<4x16x128xf32, #tpu.memory_space<vmem>>, vector<1x16x128xf32>,
    return
  }
  func.func @transform_0(%arg0: i32) -> (i32, i32) {
    %c0_i32 = arith.constant 0 : i32
    %c0_i32_0 = arith.constant 0 : i32
    return %arg0, %c0_i32 : i32, i32
  }
  func.func @transform_1(%arg0: i32) -> (i32, i32, i32) {
    %c0_i32 = arith.constant 0 : i32
    %c0_i32_0 = arith.constant 0 : i32
    %c0_i32_1 = arith.constant 0 : i32
    %c0_i32_2 = arith.constant 0 : i32
    return %c0_i32, %c0_i32_0, %c0_i32_1 : i32, i32, i32
  }
  func.func @transform_2(%arg0: i32) -> (i32, i32, i32) {
    %c0_i32 = arith.constant 0 : i32
    %c0_i32_0 = arith.constant 0 : i32
    %c0_i32_1 = arith.constant 0 : i32
    %c0_i32_2 = arith.constant 0 : i32
    return %c0_i32, %c0_i32_0, %c0_i32_1 : i32, i32, i32
  }
  func.func @transform_3(%arg0: i32) -> (i32, i32, i32) {
    %c0_i32 = arith.constant 0 : i32
    %c0_i32_0 = arith.constant 0 : i32
    %c0_i32_1 = arith.constant 0 : i32
    %c0_i32_2 = arith.constant 0 : i32
    return %c0_i32, %c0_i32_0, %c0_i32_1 : i32, i32, i32
  }
  func.func @transform_4(%arg0: i32) -> (i32, i32, i32) {
    %c0_i32 = arith.constant 0 : i32
    %c0_i32_0 = arith.constant 0 : i32
    %c0_i32_1 = arith.constant 0 : i32
    %c0_i32_2 = arith.constant 0 : i32
    return %c0_i32, %c0_i32_0, %c0_i32_1 : i32, i32, i32
  }
  func.func @transform_5(%arg0: i32) -> (i32, i32, i32) {
    %c0_i32 = arith.constant 0 : i32
    %c0_i32_0 = arith.constant 0 : i32
    %c0_i32_1 = arith.constant 0 : i32
    return %c0_i32, %arg0, %c0_i32_0 : i32, i32, i32
  }
}

</mosaic_0001>

<llo_original>
// kernel: expert_forward.1
$region0: #{expert_forward.1}
  #allocation0 [shape = 'u32[]', space=smem, size = 0x4, offset = 0x4, fixed_abs, tag = 'smem constant byte address 0x4 - core index']
  #allocation1 [shape = 'u32[144,128]{1,0:T(1,128)}', space=vmem, size = 0x12000, scoped, tag = 'internal scratch']
  %s0 = inlined_call_operand.vmem [shape: bf16[16,32], index: 0, kind: input, shape index: {}]
  %s1 = inlined_call_operand.vmem [shape: bf16[4,32,128], index: 1, kind: input, shape index: {}]
  %s2 = inlined_call_operand.vmem [shape: f32[4,1,128], index: 2, kind: input, shape index: {}]
  %s3 = inlined_call_operand.vmem [shape: bf16[4,128,128], index: 3, kind: input, shape index: {}]
  %s4 = inlined_call_operand.vmem [shape: f32[4,1,128], index: 4, kind: input, shape index: {}]
  %s5 = inlined_call_operand.vmem [shape: f32[4,16,128], index: 5, kind: output, shape index: {}]
  %s6 = sld [smem:[#allocation0]]
  $region30: #{expert_forward.1} parent=0
    _
  %s8 = ssub.s32 1, %s6
  %s9 = scalar_select 0, %s8, %s6
  // Predicated region
  $region2: #{expert_forward.1} parent=0 // pred_check
    _
  $region3: #{expert_forward.1} parent=0 // pred_check_branch
    %11 = sbr.rel (0) target = $region5
  $region4: #{expert_forward.1} parent=0 // pred_region
    _
  $region5: #{expert_forward.1} parent=0 // pred_fallthru
    _
  // Predicated region
  $region6: #{expert_forward.1} parent=0 // pred_check
    _
  $region7: #{expert_forward.1} parent=0 // pred_check_branch
    %13 = sbr.rel (0) target = $region9
  $region8: #{expert_forward.1} parent=0 // pred_region
    _
  $region9: #{expert_forward.1} parent=0 // pred_fallthru
    _
  // Predicated region
  $region10: #{expert_forward.1} parent=0 // pred_check
    _
  $region11: #{expert_forward.1} parent=0 // pred_check_branch
    %15 = sbr.rel (0) target = $region13
  $region12: #{expert_forward.1} parent=0 // pred_region
    _
  $region13: #{expert_forward.1} parent=0 // pred_fallthru
    _
  // Predicated region
  $region14: #{expert_forward.1} parent=0 // pred_check
    _
  $region15: #{expert_forward.1} parent=0 // pred_check_branch
    %17 = sbr.rel (0) target = $region17
  $region16: #{expert_forward.1} parent=0 // pred_region
    _
  $region17: #{expert_forward.1} parent=0 // pred_fallthru
    _
  // Predicated region
  $region18: #{expert_forward.1} parent=0 // pred_check
    _
  $region19: #{expert_forward.1} parent=0 // pred_check_branch
    %19 = sbr.rel (0) target = $region21
  $region20: #{expert_forward.1} parent=0 // pred_region
    _
  $region21: #{expert_forward.1} parent=0 // pred_fallthru
    _
  %v21 = vld [vmem:[%s0] sm:$0xf]
  %v22 = vld [vmem:[%s0 + $0x4] sm:$0xf]
  %v23 = vld [vmem:[%s1] sm:$0xf]
  %v24 = vld [vmem:[%s1 + $0x4] sm:$0xf]
  %v25 = vld [vmem:[%s1 + $0x8] sm:$0xf]
  %v26 = vld [vmem:[%s1 + $0xc] sm:$0xf]
  %v27 = vld [vmem:[%s2] sm:$0x1]
  %v29 = vlaneseq
  %v30 = vshrl.u32 %v29, 7
  %v31 = vsub.s32 0, %v30
  %v32 = vrot.slane %v27, %v31
  %v36 = vunpack.c.l.b16 %v21
  %v37 = vunpack.c.l.b16 %v22
  %v38 = vpack.c.b16 %v37, %v36
  %v43 = vunpack.c.l.b16 %v23
  %v44 = vunpack.c.l.b16 %v24
  %v45 = vunpack.c.l.b16 %v25
  %v46 = vunpack.c.l.b16 %v26
  %v47 = vpack.c.b16 %v44, %v43
  %v48 = vpack.c.b16 %v46, %v45
  %vm51 = vcmask 261120
  %v53 = vsel %vm51, %v38, 0
  %55 = vmatprep.subr.bf16.mxu0 0
  %56 = vmatpush1.bf16.msra.mxu0 %v47
  %57 = vmatprep.subr.bf16.mxu0 0
  %58 = vmatpush1.bf16.msra.mxu0 %v48
  %59 = vmatprep.subr.bf16.mxu0 0
  %60 = vmatpush1.bf16.msra.mxu0 0
  %61 = vmatprep.subr.bf16.mxu0 0
  %62 = vmatpush1.bf16.msra.mxu0 0
  %63 = vmatprep.subr.bf16.mxu0 0
  %64 = vmatpush1.bf16.msra.mxu0 0
  %65 = vmatprep.subr.bf16.mxu0 0
  %66 = vmatpush1.bf16.msra.mxu0 0
  %67 = vmatprep.subr.bf16.mxu0 0
  %68 = vmatpush1.bf16.msra.mxu0 0
  %69 = vmatprep.subr.bf16.mxu0 0
  %70 = vmatpush1.bf16.msra.mxu0 0
  %71 = vmatprep.subr.bf16.mxu0 0
  %72 = vmatpush1.bf16.msra.mxu0 0
  %73 = vmatprep.subr.bf16.mxu0 0
  %74 = vmatpush1.bf16.msra.mxu0 0
  %75 = vmatprep.subr.bf16.mxu0 0
  %76 = vmatpush1.bf16.msra.mxu0 0
  %77 = vmatprep.subr.bf16.mxu0 0
  %78 = vmatpush1.bf16.msra.mxu0 0
  %79 = vmatprep.subr.bf16.mxu0 0
  %80 = vmatpush1.bf16.msra.mxu0 0
  %81 = vmatprep.subr.bf16.mxu0 0
  %82 = vmatpush1.bf16.msra.mxu0 0
  %83 = vmatprep.subr.bf16.mxu0 0
  %84 = vmatpush1.bf16.msra.mxu0 0
  %85 = vmatprep.subr.bf16.mxu0 0
  %86 = vmatpush1.bf16.msra.mxu0 0
  %87 = vmatprep.mubr.bf16.mxu0 0
  %88 = vmatmul.mubr.bf16.gmra.mrb[0].mxu0 %v53
  %v89 = vpop.f32.mrb[0].mxu0
  %v90 = vadd.f32 %v32, %v89
  %v91 = vpop.f32.mrb[0].mxu0
  %v92 = vpop.f32.mrb[0].mxu0
  %v93 = vadd.f32 %v32, %v92
  %v94 = vpop.f32.mrb[0].mxu0
  %95 = vdwg.mxu0
  %v96 = vmax.f32 %v90, 0.0
  %v97 = vmax.f32 %v93, 0.0
  %v98 = vpack.c.bf16 %v97, %v96
  %v99 = vld [vmem:[%s3] sm:$0xf]
  %v100 = vld [vmem:[%s3 + $0x4] sm:$0xf]
  %v101 = vld [vmem:[%s3 + $0x8] sm:$0xf]
  %v102 = vld [vmem:[%s3 + $0xc] sm:$0xf]
  %v103 = vld [vmem:[%s3 + $0x10] sm:$0xf]
  %v104 = vld [vmem:[%s3 + $0x14] sm:$0xf]
  %v105 = vld [vmem:[%s3 + $0x18] sm:$0xf]
  %v106 = vld [vmem:[%s3 + $0x1c] sm:$0xf]
  %v107 = vld [vmem:[%s3 + $0x20] sm:$0xf]
  %v108 = vld [vmem:[%s3 + $0x24] sm:$0xf]
  %v109 = vld [vmem:[%s3 + $0x28] sm:$0xf]
  %v110 = vld [vmem:[%s3 + $0x2c] sm:$0xf]
  %v111 = vld [vmem:[%s3 + $0x30] sm:$0xf]
  %v112 = vld [vmem:[%s3 + $0x34] sm:$0xf]
  %v113 = vld [vmem:[%s3 + $0x38] sm:$0xf]
  %v114 = vld [vmem:[%s3 + $0x3c] sm:$0xf]
  %v115 = vld [vmem:[%s4] sm:$0x1]
  %v117 = vlaneseq
  %v118 = vshrl.u32 %v117, 7
  %v119 = vsub.s32 0, %v118
  %v120 = vrot.slane %v115, %v119
  %v138 = vunpack.c.l.b16 %v99
  %v139 = vunpack.c.l.b16 %v100
  %v140 = vunpack.c.l.b16 %v101
  %v141 = vunpack.c.l.b16 %v102
  %v142 = vunpack.c.l.b16 %v103
  %v143 = vunpack.c.l.b16 %v104
  %v144 = vunpack.c.l.b16 %v105
  %v145 = vunpack.c.l.b16 %v106
  %v146 = vunpack.c.l.b16 %v107
  %v147 = vunpack.c.l.b16 %v108
  %v148 = vunpack.c.l.b16 %v109
  %v149 = vunpack.c.l.b16 %v110
  %v150 = vunpack.c.l.b16 %v111
  %v151 = vunpack.c.l.b16 %v112
  %v152 = vunpack.c.l.b16 %v113
  %v153 = vunpack.c.l.b16 %v114
  %v154 = vpack.c.b16 %v139, %v138
  %v155 = vpack.c.b16 %v141, %v140
  %v156 = vpack.c.b16 %v143, %v142
  %v157 = vpack.c.b16 %v145, %v144
  %v158 = vpack.c.b16 %v147, %v146
  %v159 = vpack.c.b16 %v149, %v148
  %v160 = vpack.c.b16 %v151, %v150
  %v161 = vpack.c.b16 %v153, %v152
  %170 = vmatprep.subr.bf16.mxu0 0
  %171 = vmatpush1.bf16.msra.mxu0 %v154
  %172 = vmatprep.subr.bf16.mxu0 0
  %173 = vmatpush1.bf16.msra.mxu0 %v155
  %174 = vmatprep.subr.bf16.mxu0 0
  %175 = vmatpush1.bf16.msra.mxu0 %v156
  %176 = vmatprep.subr.bf16.mxu0 0
  %177 = vmatpush1.bf16.msra.mxu0 %v157
  %178 = vmatprep.subr.bf16.mxu0 0
  %179 = vmatpush1.bf16.msra.mxu0 %v158
  %180 = vmatprep.subr.bf16.mxu0 0
  %181 = vmatpush1.bf16.msra.mxu0 %v159
  %182 = vmatprep.subr.bf16.mxu0 0
  %183 = vmatpush1.bf16.msra.mxu0 %v160
  %184 = vmatprep.subr.bf16.mxu0 0
  %185 = vmatpush1.bf16.msra.mxu0 %v161
  %186 = vmatprep.subr.bf16.mxu0 0
  %187 = vmatpush1.bf16.msra.mxu0 0
  %188 = vmatprep.subr.bf16.mxu0 0
  %189 = vmatpush1.bf16.msra.mxu0 0
  %190 = vmatprep.subr.bf16.mxu0 0
  %191 = vmatpush1.bf16.msra.mxu0 0
  %192 = vmatprep.subr.bf16.mxu0 0
  %193 = vmatpush1.bf16.msra.mxu0 0
  %194 = vmatprep.subr.bf16.mxu0 0
  %195 = vmatpush1.bf16.msra.mxu0 0
  %196 = vmatprep.subr.bf16.mxu0 0
  %197 = vmatpush1.bf16.msra.mxu0 0
  %198 = vmatprep.subr.bf16.mxu0 0
  %199 = vmatpush1.bf16.msra.mxu0 0
  %200 = vmatprep.subr.bf16.mxu0 0
  %201 = vmatpush1.bf16.msra.mxu0 0
  %202 = vmatprep.mubr.bf16.mxu0 0
  %203 = vmatmul.mubr.bf16.gmra.mrb[0].mxu0 %v98
  %v204 = vpop.f32.mrb[0].mxu0
  %v205 = vadd.f32 %v120, %v204
  %v206 = vpop.f32.mrb[0].mxu0
  %v207 = vpop.f32.mrb[0].mxu0
  %v208 = vadd.f32 %v120, %v207
  %v209 = vpop.f32.mrb[0].mxu0
  %210 = vdwg.mxu0
  %211 = vst [vmem:[%s5] sm:$0xff] %v205
  %212 = vst [vmem:[%s5 + $0x8] sm:$0xff] %v208
  %s213 = scalar_lea.vmem %s1, 16
  %v214 = vld [vmem:[%s213] sm:$0xf]
  %v215 = vld [vmem:[%s213 + $0x4] sm:$0xf]
  %v216 = vld [vmem:[%s213 + $0x8] sm:$0xf]
  %v217 = vld [vmem:[%s213 + $0xc] sm:$0xf]
  %s218 = scalar_lea.vmem %s2, 1
  %v219 = vld [vmem:[%s218] sm:$0x1]
  %v221 = vlaneseq
  %v222 = vshrl.u32 %v221, 7
  %v223 = vsub.s32 0, %v222
  %v224 = vrot.slane %v219, %v223
  %v230 = vunpack.c.l.b16 %v214
  %v231 = vunpack.c.l.b16 %v215
  %v232 = vunpack.c.l.b16 %v216
  %v233 = vunpack.c.l.b16 %v217
  %v234 = vpack.c.b16 %v231, %v230
  %v235 = vpack.c.b16 %v233, %v232
  %238 = vmatprep.subr.bf16.mxu0 0
  %239 = vmatpush1.bf16.msra.mxu0 %v234
  %240 = vmatprep.subr.bf16.mxu0 0
  %241 = vmatpush1.bf16.msra.mxu0 %v235
  %242 = vmatprep.subr.bf16.mxu0 0
  %243 = vmatpush1.bf16.msra.mxu0 0
  %244 = vmatprep.subr.bf16.mxu0 0
  %245 = vmatpush1.bf16.msra.mxu0 0
  %246 = vmatprep.subr.bf16.mxu0 0
  %247 = vmatpush1.bf16.msra.mxu0 0
  %248 = vmatprep.subr.bf16.mxu0 0
  %249 = vmatpush1.bf16.msra.mxu0 0
  %250 = vmatprep.subr.bf16.mxu0 0
  %251 = vmatpush1.bf16.msra.mxu0 0
  %252 = vmatprep.subr.bf16.mxu0 0
  %253 = vmatpush1.bf16.msra.mxu0 0
  %254 = vmatprep.subr.bf16.mxu0 0
  %255 = vmatpush1.bf16.msra.mxu0 0
  %256 = vmatprep.subr.bf16.mxu0 0
  %257 = vmatpush1.bf16.msra.mxu0 0
  %258 = vmatprep.subr.bf16.mxu0 0
  %259 = vmatpush1.bf16.msra.mxu0 0
  %260 = vmatprep.subr.bf16.mxu0 0
  %261 = vmatpush1.bf16.msra.mxu0 0
  %262 = vmatprep.subr.bf16.mxu0 0
  %263 = vmatpush1.bf16.msra.mxu0 0
  %264 = vmatprep.subr.bf16.mxu0 0
  %265 = vmatpush1.bf16.msra.mxu0 0
  %266 = vmatprep.subr.bf16.mxu0 0
  %267 = vmatpush1.bf16.msra.mxu0 0
  %268 = vmatprep.subr.bf16.mxu0 0
  %269 = vmatpush1.bf16.msra.mxu0 0
  %270 = vmatprep.mubr.bf16.mxu0 0
  %271 = vmatmul.mubr.bf16.gmra.mrb[0].mxu0 %v53
  %v272 = vpop.f32.mrb[0].mxu0
  %v273 = vadd.f32 %v224, %v272
  %v274 = vpop.f32.mrb[0].mxu0
  %v275 = vpop.f32.mrb[0].mxu0
  %v276 = vadd.f32 %v224, %v275
  %v277 = vpop.f32.mrb[0].mxu0
  %278 = vdwg.mxu0
  %v279 = vmax.f32 %v273, 0.0
  %v280 = vmax.f32 %v276, 0.0
  %v281 = vpack.c.bf16 %v280, %v279
  %s282 = scalar_lea.vmem %s3, 64
  %v283 = vld [vmem:[%s282] sm:$0xf]
  %v284 = vld [vmem:[%s282 + $0x4] sm:$0xf]
  %v285 = vld [vmem:[%s282 + $0x8] sm:$0xf]
  %v286 = vld [vmem:[%s282 + $0xc] sm:$0xf]
  %v287 = vld [vmem:[%s282 + $0x10] sm:$0xf]
  %v288 = vld [vmem:[%s282 + $0x14] sm:$0xf]
  %v289 = vld [vmem:[%s282 + $0x18] sm:$0xf]
  %v290 = vld [vmem:[%s282 + $0x1c] sm:$0xf]
  %v291 = vld [vmem:[%s282 + $0x20] sm:$0xf]
  %v292 = vld [vmem:[%s282 + $0x24] sm:$0xf]
  %v293 = vld [vmem:[%s282 + $0x28] sm:$0xf]
  %v294 = vld [vmem:[%s282 + $0x2c] sm:$0xf]
  %v295 = vld [vmem:[%s282 + $0x30] sm:$0xf]
  %v296 = vld [vmem:[%s282 + $0x34] sm:$0xf]
  %v297 = vld [vmem:[%s282 + $0x38] sm:$0xf]
  %v298 = vld [vmem:[%s282 + $0x3c] sm:$0xf]
  %s299 = scalar_lea.vmem %s4, 1
  %v300 = vld [vmem:[%s299] sm:$0x1]
  %v302 = vlaneseq
  %v303 = vshrl.u32 %v302, 7
  %v304 = vsub.s32 0, %v303
  %v305 = vrot.slane %v300, %v304
  %v323 = vunpack.c.l.b16 %v283
  %v324 = vunpack.c.l.b16 %v284
  %v325 = vunpack.c.l.b16 %v285
  %v326 = vunpack.c.l.b16 %v286
  %v327 = vunpack.c.l.b16 %v287
  %v328 = vunpack.c.l.b16 %v288
  %v329 = vunpack.c.l.b16 %v289
  %v330 = vunpack.c.l.b16 %v290
  %v331 = vunpack.c.l.b16 %v291
  %v332 = vunpack.c.l.b16 %v292
  %v333 = vunpack.c.l.b16 %v293
  %v334 = vunpack.c.l.b16 %v294
  %v335 = vunpack.c.l.b16 %v295
  %v336 = vunpack.c.l.b16 %v296
  %v337 = vunpack.c.l.b16 %v297
  %v338 = vunpack.c.l.b16 %v298
  %v339 = vpack.c.b16 %v324, %v323
  %v340 = vpack.c.b16 %v326, %v325
  %v341 = vpack.c.b16 %v328, %v327
  %v342 = vpack.c.b16 %v330, %v329
  %v343 = vpack.c.b16 %v332, %v331
  %v344 = vpack.c.b16 %v334, %v333
  %v345 = vpack.c.b16 %v336, %v335
  %v346 = vpack.c.b16 %v338, %v337
  %355 = vmatprep.subr.bf16.mxu0 0
  %356 = vmatpush1.bf16.msra.mxu0 %v339
  %357 = vmatprep.subr.bf16.mxu0 0
  %358 = vmatpush1.bf16.msra.mxu0 %v340
  %359 = vmatprep.subr.bf16.mxu0 0
  %360 = vmatpush1.bf16.msra.mxu0 %v341
  %361 = vmatprep.subr.bf16.mxu0 0
  %362 = vmatpush1.bf16.msra.mxu0 %v342
  %363 = vmatprep.subr.bf16.mxu0 0
  %364 = vmatpush1.bf16.msra.mxu0 %v343
  %365 = vmatprep.subr.bf16.mxu0 0
  %366 = vmatpush1.bf16.msra.mxu0 %v344
  %367 = vmatprep.subr.bf16.mxu0 0
  %368 = vmatpush1.bf16.msra.mxu0 %v345
  %369 = vmatprep.subr.bf16.mxu0 0
  %370 = vmatpush1.bf16.msra.mxu0 %v346
  %371 = vmatprep.subr.bf16.mxu0 0
  %372 = vmatpush1.bf16.msra.mxu0 0
  %373 = vmatprep.subr.bf16.mxu0 0
  %374 = vmatpush1.bf16.msra.mxu0 0
  %375 = vmatprep.subr.bf16.mxu0 0
  %376 = vmatpush1.bf16.msra.mxu0 0
  %377 = vmatprep.subr.bf16.mxu0 0
  %378 = vmatpush1.bf16.msra.mxu0 0
  %379 = vmatprep.subr.bf16.mxu0 0
  %380 = vmatpush1.bf16.msra.mxu0 0
  %381 = vmatprep.subr.bf16.mxu0 0
  %382 = vmatpush1.bf16.msra.mxu0 0
  %383 = vmatprep.subr.bf16.mxu0 0
  %384 = vmatpush1.bf16.msra.mxu0 0
  %385 = vmatprep.subr.bf16.mxu0 0
  %386 = vmatpush1.bf16.msra.mxu0 0
  %387 = vmatprep.mubr.bf16.mxu0 0
  %388 = vmatmul.mubr.bf16.gmra.mrb[0].mxu0 %v281
  %v389 = vpop.f32.mrb[0].mxu0
  %v390 = vadd.f32 %v305, %v389
  %v391 = vpop.f32.mrb[0].mxu0
  %v392 = vpop.f32.mrb[0].mxu0
  %v393 = vadd.f32 %v305, %v392
  %v394 = vpop.f32.mrb[0].mxu0
  %395 = vdwg.mxu0
  %s396 = scalar_lea.vmem %s5, 16
  %397 = vst [vmem:[%s396] sm:$0xff] %v390
  %398 = vst [vmem:[%s396 + $0x8] sm:$0xff] %v393
  %s399 = scalar_lea.vmem %s1, 32
  %v400 = vld [vmem:[%s399] sm:$0xf]
  %v401 = vld [vmem:[%s399 + $0x4] sm:$0xf]
  %v402 = vld [vmem:[%s399 + $0x8] sm:$0xf]
  %v403 = vld [vmem:[%s399 + $0xc] sm:$0xf]
  %s404 = scalar_lea.vmem %s2, 2
  %v405 = vld [vmem:[%s404] sm:$0x1]
  %v407 = vlaneseq
  %v408 = vshrl.u32 %v407, 7
  %v409 = vsub.s32 0, %v408
  %v410 = vrot.slane %v405, %v409
  %v416 = vunpack.c.l.b16 %v400
  %v417 = vunpack.c.l.b16 %v401
  %v418 = vunpack.c.l.b16 %v402
  %v419 = vunpack.c.l.b16 %v403
  %v420 = vpack.c.b16 %v417, %v416
  %v421 = vpack.c.b16 %v419, %v418
  %424 = vmatprep.subr.bf16.mxu0 0
  %425 = vmatpush1.bf16.msra.mxu0 %v420
  %426 = vmatprep.subr.bf16.mxu0 0
  %427 = vmatpush1.bf16.msra.mxu0 %v421
  %428 = vmatprep.subr.bf16.mxu0 0
  %429 = vmatpush1.bf16.msra.mxu0 0
  %430 = vmatprep.subr.bf16.mxu0 0
  %431 = vmatpush1.bf16.msra.mxu0 0
  %432 = vmatprep.subr.bf16.mxu0 0
  %433 = vmatpush1.bf16.msra.mxu0 0
  %434 = vmatprep.subr.bf16.mxu0 0
  %435 = vmatpush1.bf16.msra.mxu0 0
  %436 = vmatprep.subr.bf16.mxu0 0
  %437 = vmatpush1.bf16.msra.mxu0 0
  %438 = vmatprep.subr.bf16.mxu0 0
  %439 = vmatpush1.bf16.msra.mxu0 0
  %440 = vmatprep.subr.bf16.mxu0 0
  %441 = vmatpush1.bf16.msra.mxu0 0
  %442 = vmatprep.subr.bf16.mxu0 0
  %443 = vmatpush1.bf16.msra.mxu0 0
  %444 = vmatprep.subr.bf16.mxu0 0
  %445 = vmatpush1.bf16.msra.mxu0 0
  %446 = vmatprep.subr.bf16.mxu0 0
  %447 = vmatpush1.bf16.msra.mxu0 0
  %448 = vmatprep.subr.bf16.mxu0 0
  %449 = vmatpush1.bf16.msra.mxu0 0
  %450 = vmatprep.subr.bf16.mxu0 0
  %451 = vmatpush1.bf16.msra.mxu0 0
  %452 = vmatprep.subr.bf16.mxu0 0
  %453 = vmatpush1.bf16.msra.mxu0 0
  %454 = vmatprep.subr.bf16.mxu0 0
  %455 = vmatpush1.bf16.msra.mxu0 0
  %456 = vmatprep.mubr.bf16.mxu0 0
  %457 = vmatmul.mubr.bf16.gmra.mrb[0].mxu0 %v53
  %v458 = vpop.f32.mrb[0].mxu0
  %v459 = vadd.f32 %v410, %v458
  %v460 = vpop.f32.mrb[0].mxu0
  %v461 = vpop.f32.mrb[0].mxu0
  %v462 = vadd.f32 %v410, %v461
  %v463 = vpop.f32.mrb[0].mxu0
  %464 = vdwg.mxu0
  %v465 = vmax.f32 %v459, 0.0
  %v466 = vmax.f32 %v462, 0.0
  %v467 = vpack.c.bf16 %v466, %v465
  %s468 = scalar_lea.vmem %s3, 128
  %v469 = vld [vmem:[%s468] sm:$0xf]
  %v470 = vld [vmem:[%s468 + $0x4] sm:$0xf]
  %v471 = vld [vmem:[%s468 + $0x8] sm:$0xf]
  %v472 = vld [vmem:[%s468 + $0xc] sm:$0xf]
  %v473 = vld [vmem:[%s468 + $0x10] sm:$0xf]
  %v474 = vld [vmem:[%s468 + $0x14] sm:$0xf]
  %v475 = vld [vmem:[%s468 + $0x18] sm:$0xf]
  %v476 = vld [vmem:[%s468 + $0x1c] sm:$0xf]
  %v477 = vld [vmem:[%s468 + $0x20] sm:$0xf]
  %v478 = vld [vmem:[%s468 + $0x24] sm:$0xf]
  %v479 = vld [vmem:[%s468 + $0x28] sm:$0xf]
  %v480 = vld [vmem:[%s468 + $0x2c] sm:$0xf]
  %v481 = vld [vmem:[%s468 + $0x30] sm:$0xf]
  %v482 = vld [vmem:[%s468 + $0x34] sm:$0xf]
  %v483 = vld [vmem:[%s468 + $0x38] sm:$0xf]
  %v484 = vld [vmem:[%s468 + $0x3c] sm:$0xf]
  %s485 = scalar_lea.vmem %s4, 2
  %v486 = vld [vmem:[%s485] sm:$0x1]
  %v488 = vlaneseq
  %v489 = vshrl.u32 %v488, 7
  %v490 = vsub.s32 0, %v489
  %v491 = vrot.slane %v486, %v490
  %v509 = vunpack.c.l.b16 %v469
  %v510 = vunpack.c.l.b16 %v470
  %v511 = vunpack.c.l.b16 %v471
  %v512 = vunpack.c.l.b16 %v472
  %v513 = vunpack.c.l.b16 %v473
  %v514 = vunpack.c.l.b16 %v474
  %v515 = vunpack.c.l.b16 %v475
  %v516 = vunpack.c.l.b16 %v476
  %v517 = vunpack.c.l.b16 %v477
  %v518 = vunpack.c.l.b16 %v478
  %v519 = vunpack.c.l.b16 %v479
  %v520 = vunpack.c.l.b16 %v480
  %v521 = vunpack.c.l.b16 %v481
  %v522 = vunpack.c.l.b16 %v482
  %v523 = vunpack.c.l.b16 %v483
  %v524 = vunpack.c.l.b16 %v484
  %v525 = vpack.c.b16 %v510, %v509
  %v526 = vpack.c.b16 %v512, %v511
  %v527 = vpack.c.b16 %v514, %v513
  %v528 = vpack.c.b16 %v516, %v515
  %v529 = vpack.c.b16 %v518, %v517
  %v530 = vpack.c.b16 %v520, %v519
  %v531 = vpack.c.b16 %v522, %v521
  %v532 = vpack.c.b16 %v524, %v523
  %541 = vmatprep.subr.bf16.mxu0 0
  %542 = vmatpush1.bf16.msra.mxu0 %v525
  %543 = vmatprep.subr.bf16.mxu0 0
  %544 = vmatpush1.bf16.msra.mxu0 %v526
  %545 = vmatprep.subr.bf16.mxu0 0
  %546 = vmatpush1.bf16.msra.mxu0 %v527
  %547 = vmatprep.subr.bf16.mxu0 0
  %548 = vmatpush1.bf16.msra.mxu0 %v528
  %549 = vmatprep.subr.bf16.mxu0 0
  %550 = vmatpush1.bf16.msra.mxu0 %v529
  %551 = vmatprep.subr.bf16.mxu0 0
  %552 = vmatpush1.bf16.msra.mxu0 %v530
  %553 = vmatprep.subr.bf16.mxu0 0
  %554 = vmatpush1.bf16.msra.mxu0 %v531
  %555 = vmatprep.subr.bf16.mxu0 0
  %556 = vmatpush1.bf16.msra.mxu0 %v532
  %557 = vmatprep.subr.bf16.mxu0 0
  %558 = vmatpush1.bf16.msra.mxu0 0
  %559 = vmatprep.subr.bf16.mxu0 0
  %560 = vmatpush1.bf16.msra.mxu0 0
  %561 = vmatprep.subr.bf16.mxu0 0
  %562 = vmatpush1.bf16.msra.mxu0 0
  %563 = vmatprep.subr.bf16.mxu0 0
  %564 = vmatpush1.bf16.msra.mxu0 0
  %565 = vmatprep.subr.bf16.mxu0 0
  %566 = vmatpush1.bf16.msra.mxu0 0
  %567 = vmatprep.subr.bf16.mxu0 0
  %568 = vmatpush1.bf16.msra.mxu0 0
  %569 = vmatprep.subr.bf16.mxu0 0
  %570 = vmatpush1.bf16.msra.mxu0 0
  %571 = vmatprep.subr.bf16.mxu0 0
  %572 = vmatpush1.bf16.msra.mxu0 0
  %573 = vmatprep.mubr.bf16.mxu0 0
  %574 = vmatmul.mubr.bf16.gmra.mrb[0].mxu0 %v467
  %v575 = vpop.f32.mrb[0].mxu0
  %v576 = vadd.f32 %v491, %v575
  %v577 = vpop.f32.mrb[0].mxu0
  %v578 = vpop.f32.mrb[0].mxu0
  %v579 = vadd.f32 %v491, %v578
  %v580 = vpop.f32.mrb[0].mxu0
  %581 = vdwg.mxu0
  %s582 = scalar_lea.vmem %s5, 32
  %583 = vst [vmem:[%s582] sm:$0xff] %v576
  %584 = vst [vmem:[%s582 + $0x8] sm:$0xff] %v579
  %s585 = scalar_lea.vmem %s1, 48
  %v586 = vld [vmem:[%s585] sm:$0xf]
  %v587 = vld [vmem:[%s585 + $0x4] sm:$0xf]
  %v588 = vld [vmem:[%s585 + $0x8] sm:$0xf]
  %v589 = vld [vmem:[%s585 + $0xc] sm:$0xf]
  %s590 = scalar_lea.vmem %s2, 3
  %v591 = vld [vmem:[%s590] sm:$0x1]
  %v593 = vlaneseq
  %v594 = vshrl.u32 %v593, 7
  %v595 = vsub.s32 0, %v594
  %v596 = vrot.slane %v591, %v595
  %v602 = vunpack.c.l.b16 %v586
  %v603 = vunpack.c.l.b16 %v587
  %v604 = vunpack.c.l.b16 %v588
  %v605 = vunpack.c.l.b16 %v589
  %v606 = vpack.c.b16 %v603, %v602
  %v607 = vpack.c.b16 %v605, %v604
  %610 = vmatprep.subr.bf16.mxu0 0
  %611 = vmatpush1.bf16.msra.mxu0 %v606
  %612 = vmatprep.subr.bf16.mxu0 0
  %613 = vmatpush1.bf16.msra.mxu0 %v607
  %614 = vmatprep.subr.bf16.mxu0 0
  %615 = vmatpush1.bf16.msra.mxu0 0
  %616 = vmatprep.subr.bf16.mxu0 0
  %617 = vmatpush1.bf16.msra.mxu0 0
  %618 = vmatprep.subr.bf16.mxu0 0
  %619 = vmatpush1.bf16.msra.mxu0 0
  %620 = vmatprep.subr.bf16.mxu0 0
  %621 = vmatpush1.bf16.msra.mxu0 0
  %622 = vmatprep.subr.bf16.mxu0 0
  %623 = vmatpush1.bf16.msra.mxu0 0
  %624 = vmatprep.subr.bf16.mxu0 0
  %625 = vmatpush1.bf16.msra.mxu0 0
  %626 = vmatprep.subr.bf16.mxu0 0
  %627 = vmatpush1.bf16.msra.mxu0 0
  %628 = vmatprep.subr.bf16.mxu0 0
  %629 = vmatpush1.bf16.msra.mxu0 0
  %630 = vmatprep.subr.bf16.mxu0 0
  %631 = vmatpush1.bf16.msra.mxu0 0
  %632 = vmatprep.subr.bf16.mxu0 0
  %633 = vmatpush1.bf16.msra.mxu0 0
  %634 = vmatprep.subr.bf16.mxu0 0
  %635 = vmatpush1.bf16.msra.mxu0 0
  %636 = vmatprep.subr.bf16.mxu0 0
  %637 = vmatpush1.bf16.msra.mxu0 0
  %638 = vmatprep.subr.bf16.mxu0 0
  %639 = vmatpush1.bf16.msra.mxu0 0
  %640 = vmatprep.subr.bf16.mxu0 0
  %641 = vmatpush1.bf16.msra.mxu0 0
  %642 = vmatprep.mubr.bf16.mxu0 0
  %643 = vmatmul.mubr.bf16.gmra.mrb[0].mxu0 %v53
  %v644 = vpop.f32.mrb[0].mxu0
  %v645 = vadd.f32 %v596, %v644
  %v646 = vpop.f32.mrb[0].mxu0
  %v647 = vpop.f32.mrb[0].mxu0
  %v648 = vadd.f32 %v596, %v647
  %v649 = vpop.f32.mrb[0].mxu0
  %650 = vdwg.mxu0
  %v651 = vmax.f32 %v645, 0.0
  %v652 = vmax.f32 %v648, 0.0
  %v653 = vpack.c.bf16 %v652, %v651
  %s654 = scalar_lea.vmem %s3, 192
  %v655 = vld [vmem:[%s654] sm:$0xf]
  %v656 = vld [vmem:[%s654 + $0x4] sm:$0xf]
  %v657 = vld [vmem:[%s654 + $0x8] sm:$0xf]
  %v658 = vld [vmem:[%s654 + $0xc] sm:$0xf]
  %v659 = vld [vmem:[%s654 + $0x10] sm:$0xf]
  %v660 = vld [vmem:[%s654 + $0x14] sm:$0xf]
  %v661 = vld [vmem:[%s654 + $0x18] sm:$0xf]
  %v662 = vld [vmem:[%s654 + $0x1c] sm:$0xf]
  %v663 = vld [vmem:[%s654 + $0x20] sm:$0xf]
  %v664 = vld [vmem:[%s654 + $0x24] sm:$0xf]
  %v665 = vld [vmem:[%s654 + $0x28] sm:$0xf]
  %v666 = vld [vmem:[%s654 + $0x2c] sm:$0xf]
  %v667 = vld [vmem:[%s654 + $0x30] sm:$0xf]
  %v668 = vld [vmem:[%s654 + $0x34] sm:$0xf]
  %v669 = vld [vmem:[%s654 + $0x38] sm:$0xf]
  %v670 = vld [vmem:[%s654 + $0x3c] sm:$0xf]
  %s671 = scalar_lea.vmem %s4, 3
  %v672 = vld [vmem:[%s671] sm:$0x1]
  %v674 = vlaneseq
  %v675 = vshrl.u32 %v674, 7
  %v676 = vsub.s32 0, %v675
  %v677 = vrot.slane %v672, %v676
  %v695 = vunpack.c.l.b16 %v655
  %v696 = vunpack.c.l.b16 %v656
  %v697 = vunpack.c.l.b16 %v657
  %v698 = vunpack.c.l.b16 %v658
  %v699 = vunpack.c.l.b16 %v659
  %v700 = vunpack.c.l.b16 %v660
  %v701 = vunpack.c.l.b16 %v661
  %v702 = vunpack.c.l.b16 %v662
  %v703 = vunpack.c.l.b16 %v663
  %v704 = vunpack.c.l.b16 %v664
  %v705 = vunpack.c.l.b16 %v665
  %v706 = vunpack.c.l.b16 %v666
  %v707 = vunpack.c.l.b16 %v667
  %v708 = vunpack.c.l.b16 %v668
  %v709 = vunpack.c.l.b16 %v669
  %v710 = vunpack.c.l.b16 %v670
  %v711 = vpack.c.b16 %v696, %v695
  %v712 = vpack.c.b16 %v698, %v697
  %v713 = vpack.c.b16 %v700, %v699
  %v714 = vpack.c.b16 %v702, %v701
  %v715 = vpack.c.b16 %v704, %v703
  %v716 = vpack.c.b16 %v706, %v705
  %v717 = vpack.c.b16 %v708, %v707
  %v718 = vpack.c.b16 %v710, %v709
  %727 = vmatprep.subr.bf16.mxu0 0
  %728 = vmatpush1.bf16.msra.mxu0 %v711
  %729 = vmatprep.subr.bf16.mxu0 0
  %730 = vmatpush1.bf16.msra.mxu0 %v712
  %731 = vmatprep.subr.bf16.mxu0 0
  %732 = vmatpush1.bf16.msra.mxu0 %v713
  %733 = vmatprep.subr.bf16.mxu0 0
  %734 = vmatpush1.bf16.msra.mxu0 %v714
  %735 = vmatprep.subr.bf16.mxu0 0
  %736 = vmatpush1.bf16.msra.mxu0 %v715
  %737 = vmatprep.subr.bf16.mxu0 0
  %738 = vmatpush1.bf16.msra.mxu0 %v716
  %739 = vmatprep.subr.bf16.mxu0 0
  %740 = vmatpush1.bf16.msra.mxu0 %v717
  %741 = vmatprep.subr.bf16.mxu0 0
  %742 = vmatpush1.bf16.msra.mxu0 %v718
  %743 = vmatprep.subr.bf16.mxu0 0
  %744 = vmatpush1.bf16.msra.mxu0 0
  %745 = vmatprep.subr.bf16.mxu0 0
  %746 = vmatpush1.bf16.msra.mxu0 0
  %747 = vmatprep.subr.bf16.mxu0 0
  %748 = vmatpush1.bf16.msra.mxu0 0
  %749 = vmatprep.subr.bf16.mxu0 0
  %750 = vmatpush1.bf16.msra.mxu0 0
  %751 = vmatprep.subr.bf16.mxu0 0
  %752 = vmatpush1.bf16.msra.mxu0 0
  %753 = vmatprep.subr.bf16.mxu0 0
  %754 = vmatpush1.bf16.msra.mxu0 0
  %755 = vmatprep.subr.bf16.mxu0 0
  %756 = vmatpush1.bf16.msra.mxu0 0
  %757 = vmatprep.subr.bf16.mxu0 0
  %758 = vmatpush1.bf16.msra.mxu0 0
  %759 = vmatprep.mubr.bf16.mxu0 0
  %760 = vmatmul.mubr.bf16.gmra.mrb[0].mxu0 %v653
  %v761 = vpop.f32.mrb[0].mxu0
  %v762 = vadd.f32 %v677, %v761
  %v763 = vpop.f32.mrb[0].mxu0
  %v764 = vpop.f32.mrb[0].mxu0
  %v765 = vadd.f32 %v677, %v764
  %v766 = vpop.f32.mrb[0].mxu0
  %767 = vdwg.mxu0
  %s768 = scalar_lea.vmem %s5, 48
  %769 = vst [vmem:[%s768] sm:$0xff] %v762
  %770 = vst [vmem:[%s768 + $0x8] sm:$0xff] %v765
  // Predicated region
  $region22: #{expert_forward.1} parent=0 // pred_check
    _
  $region23: #{expert_forward.1} parent=0 // pred_check_branch
    %772 = sbr.rel (0) target = $region25
  $region24: #{expert_forward.1} parent=0 // pred_region
    _
  $region25: #{expert_forward.1} parent=0 // pred_fallthru
    _
  // Predicated region
  $region26: #{expert_forward.1} parent=0 // pred_check
    _
  $region27: #{expert_forward.1} parent=0 // pred_check_branch
    %774 = sbr.rel (0) target = $region29
  $region28: #{expert_forward.1} parent=0 // pred_region
    _
  $region29: #{expert_forward.1} parent=0 // pred_fallthru
    _

</llo_original>
